<compile_context>
chip_gen: v7x
topology: tpu7x:2x2x1
jax: 0.10.0
libtpu: 0.0.40
codegen_flags: <defaults>
</compile_context>

<pallas_src>
import jax
import jax.numpy as jnp
from jax.experimental import pallas as pl
from jax.experimental.pallas import tpu as pltpu

_LANE = 128      # vreg lane width: output last dim padded to a multiple of this
_SUBLANE = 8     # vreg sublane count: batch tiles are multiples of this
_NEG_BIG = -1e30  # bias for padded logit columns -> exp() underflows to exactly 0


def _round_up(v, m):
    return ((v + m - 1) // m) * m


def _mlp_linear_kernel(x_ref, w_ref, b_ref, o_ref):
    # z = x @ W + b  -- bf16 (or native) operands on the MXU, f32 accumulation.
    z = jnp.dot(x_ref[...], w_ref[...], preferred_element_type=jnp.float32)
    z = z + b_ref[...]  # (tile_m, Cout_pad) + (1, Cout_pad) broadcast, f32

    # Numerically stable log_softmax over the last dim, all in f32.
    # Padded columns have z ~= -1e30: they never win the max and their exp()
    # contribution to the denominator is exactly 0.
    m = jnp.max(z, axis=-1, keepdims=True)
    shifted = z - m
    lse = jnp.log(jnp.sum(jnp.exp(shifted), axis=-1, keepdims=True))
    o_ref[...] = (shifted - lse).astype(o_ref.dtype)


def mlp_linear_log_softmax(x, weight_t, bias, *, tile_m=None,
                           matmul_dtype=jnp.bfloat16):
    """log_softmax(x @ weight_t + bias, axis=-1).

    x: (N, Cin), weight_t: (Cin, Cout) (= PyTorch weight.T), bias: (Cout,).
    Returns (N, Cout) in x.dtype.
    """
    N, Cin = x.shape
    Cout = weight_t.shape[1]
    out_dtype = x.dtype

    # --- MXU-friendly operand dtype (f32 accumulation inside the kernel). ------
    if matmul_dtype is not None:
        x_mm = x.astype(matmul_dtype)
        w_mm = weight_t.astype(matmul_dtype)
    else:
        x_mm, w_mm = x, weight_t
    bias_f32 = bias.astype(jnp.float32)  # keep pad bias (-1e30) in f32 explicitly

    # --- Lane-dense output: pad Cout up to a multiple of 128. ------------------
    Cout_pad = _round_up(Cout, _LANE)
    if Cout_pad != Cout:
        pad = Cout_pad - Cout
        w_mm = jnp.pad(w_mm, ((0, 0), (0, pad)))           # zero weight columns
        bias_f32 = jnp.concatenate(
            [bias_f32, jnp.full((pad,), _NEG_BIG, dtype=jnp.float32)])
    bias2d = bias_f32.reshape(1, Cout_pad)

    x_isz = jnp.dtype(x_mm.dtype).itemsize
    w_isz = jnp.dtype(w_mm.dtype).itemsize
    o_isz = jnp.dtype(out_dtype).itemsize

    # --- Generation-aware VMEM budget. -----------------------------------------
    try:
        vmem_cap = int(pltpu.get_tpu_info().vmem_capacity_bytes)
    except Exception:
        vmem_cap = 64 << 20  # most conservative known generation (v7x)
    budget = int(vmem_cap * 0.70)  # leave headroom for compiler-internal scratch

    # Resident (tile_m-independent) footprint: single-buffered weight + bias.
    fixed_bytes = Cin * Cout_pad * w_isz + Cout_pad * 4
    # Per-output-row footprint: double-buffered x tile, double-buffered out tile,
    # plus ~3 live f32 temporaries of shape (tile_m, Cout_pad) (z / shifted / exp).
    per_row_bytes = 2 * Cin * x_isz + 2 * Cout_pad * o_isz + 3 * Cout_pad * 4

    # --- Batch tiling: budget-derived, >=2 grid steps when N allows (v7x 2 TCs).
    if tile_m is None:
        tile_m = min(512, _round_up(N, _SUBLANE))
        if N >= 2 * _SUBLANE:
            tile_m = min(tile_m, _round_up(pl.cdiv(N, 2), _SUBLANE))
        fit_rows = (budget - fixed_bytes) // per_row_bytes
        tile_m_fit = max(_SUBLANE, (fit_rows // _SUBLANE) * _SUBLANE)
        tile_m = max(_SUBLANE, min(tile_m, tile_m_fit))
    # TODO(synk): for very large Cout (vocab/classifier heads) the resident-weight
    # design hits a VMEM ceiling; a Cout-tiled online-logsumexp (flash-style)
    # variant would be needed instead of only shrinking tile_m.

    grid = (pl.cdiv(N, tile_m),)

    # --- VMEM limit: always set, need + headroom, capped at ~75% of physical. --
    vmem_need = fixed_bytes + per_row_bytes * tile_m
    vmem_limit = min(int(vmem_cap * 3 // 4),
                     max(int(vmem_need * 3 // 2), 32 << 20))

    cost = pl.CostEstimate(
        flops=2 * N * Cin * Cout_pad,
        transcendentals=N * Cout_pad + N,  # exp per logit + log per row
        bytes_accessed=(N * Cin * x_isz + Cin * Cout_pad * w_isz
                        + Cout_pad * 4 + N * Cout_pad * o_isz),
    )

    out_padded = pl.pallas_call(
        _mlp_linear_kernel,
        out_shape=jax.ShapeDtypeStruct((N, Cout_pad), out_dtype),
        grid_spec=pltpu.PrefetchScalarGridSpec(
            num_scalar_prefetch=0,
            grid=grid,
            in_specs=[
                pl.BlockSpec((tile_m, Cin), lambda i: (i, 0)),
                # Weight and bias are grid-invariant: keep a single resident
                # copy in VMEM (no per-step double-buffering).
                pl.BlockSpec(memory_space=pltpu.MemorySpace.VMEM),
                pl.BlockSpec(memory_space=pltpu.MemorySpace.VMEM),
            ],
            out_specs=pl.BlockSpec((tile_m, Cout_pad), lambda i: (i, 0)),
        ),
        compiler_params=pltpu.CompilerParams(
            dimension_semantics=("parallel",),
            vmem_limit_bytes=vmem_limit,
        ),
        cost_estimate=cost,
    )(x_mm, w_mm, bias2d)

    # Slice padded logit columns back off (cheap XLA slice outside the kernel).
    return out_padded[:, :Cout]


if __name__ == "__main__":
    # Small shapes consistent with the module: batch=8, in_channels=32, out_channels=16
    batch, in_channels, out_channels = 8, 32, 16

    key = jax.random.PRNGKey(0)
    kx, kw, kb = jax.random.split(key, 3)

    x = jax.random.normal(kx, (batch, in_channels), dtype=jnp.float32)

    # Deterministic parameter init (mimics torch.nn.Linear's uniform(-1/sqrt(fan_in), +)).
    bound = 1.0 / jnp.sqrt(in_channels)
    # PyTorch weight shape is (out, in); we store its transpose (in, out).
    weight_t = jax.random.uniform(
        kw, (in_channels, out_channels), minval=-bound, maxval=bound, dtype=jnp.float32
    )
    bias = jax.random.uniform(
        kb, (out_channels,), minval=-bound, maxval=bound, dtype=jnp.float32
    )

    out = mlp_linear_log_softmax(x, weight_t, bias)
    out = jax.block_until_ready(out)

    # Reference: mirror the kernel's bf16 matmul operands + f32 accumulation.
    z_ref = jnp.dot(x.astype(jnp.bfloat16), weight_t.astype(jnp.bfloat16),
                    preferred_element_type=jnp.float32) + bias
    ref = jax.nn.log_softmax(z_ref, axis=-1)

    assert out.shape == (batch, out_channels)
    assert jnp.allclose(out, ref, atol=2e-3, rtol=2e-3), \
        float(jnp.max(jnp.abs(out - ref)))

    print("KERNEL_OK")
</pallas_src>

<mosaic_0001>
module attributes {stable_mosaic.version = 11 : i64} {
  func.func @_mlp_linear_kernel(%arg0: i32, %arg1: memref<8x32xbf16, #tpu.memory_space<vmem>>, %arg2: memref<32x128xbf16, #tpu.memory_space<vmem>>, %arg3: memref<1x128xf32, #tpu.memory_space<vmem>>, %arg4: memref<8x128xf32, #tpu.memory_space<vmem>>) attributes {dimension_semantics = [#tpu.dimension_semantics<parallel>], iteration_bounds = array<i64: 1>, scalar_prefetch = 0 : i64, scratch_operands = 0 : i64, tpu.core_type = #tpu.core_type<tc>, window_params = [{transform_indices = @transform_0, window_bounds = array<i64: 8, 32>}, {pipeline_mode = #tpu.pipeline_mode<synchronous>, transform_indices = @transform_1, window_bounds = array<i64: 32, 128>}, {pipeline_mode = #tpu.pipeline_mode<synchronous>, transform_indices = @transform_2, window_bounds = array<i64: 1, 128>}, {transform_indices = @transform_3, window_bounds = array<i64: 8, 128>}]} {
    %c0 = arith.constant 0 : index
    %c0_0 = arith.constant 0 : index
    %0 = vector.load %arg1[%c0, %c0_0] : memref<8x32xbf16, #tpu.memory_space<vmem>>, vector<8x32xbf16>
    %c0_1 = arith.constant 0 : index
    %c0_2 = arith.constant 0 : index
    %1 = vector.load %arg2[%c0_1, %c0_2] : memref<32x128xbf16, #tpu.memory_space<vmem>>, vector<32x128xbf16>
    %cst = arith.constant dense<0.000000e+00> : vector<8x128xf32>
    %2 = tpu.matmul %0, %1, %cst {dimension_numbers = #tpu.dot_dimension_numbers<[1], [0], [0], [1], [0, 0, 1, 1], [], []>} : vector<8x32xbf16>, vector<32x128xbf16>, vector<8x128xf32> -> vector<8x128xf32>
    %c0_3 = arith.constant 0 : index
    %c0_4 = arith.constant 0 : index
    %3 = vector.load %arg3[%c0_3, %c0_4] : memref<1x128xf32, #tpu.memory_space<vmem>>, vector<1x128xf32>
    %4 = vector.broadcast %3 : vector<1x128xf32> to vector<8x128xf32>
    %5 = arith.addf %2, %4 : vector<8x128xf32>
    %cst_5 = arith.constant dense<0xFF800000> : vector<8xf32>
    %6 = vector.multi_reduction <maximumf>, %5, %cst_5 [1] : vector<8x128xf32> to vector<8xf32>
    %7 = vector.shape_cast %6 : vector<8xf32> to vector<8x1xf32>
    %8 = vector.broadcast %7 : vector<8x1xf32> to vector<8x128xf32>
    %9 = arith.subf %5, %8 : vector<8x128xf32>
    %10 = math.exp %9 : vector<8x128xf32>
    %cst_6 = arith.constant dense<0.000000e+00> : vector<8xf32>
    %11 = vector.multi_reduction <add>, %10, %cst_6 [1] : vector<8x128xf32> to vector<8xf32>
    %12 = vector.shape_cast %11 : vector<8xf32> to vector<8x1xf32>
    %13 = math.log %12 : vector<8x1xf32>
    %14 = vector.broadcast %13 : vector<8x1xf32> to vector<8x128xf32>
    %15 = arith.subf %9, %14 : vector<8x128xf32>
    %c0_7 = arith.constant 0 : index
    %c0_8 = arith.constant 0 : index
    %16 = vector.load %arg4[%c0_7, %c0_8] : memref<8x128xf32, #tpu.memory_space<vmem>>, vector<8x128xf32>
    tpu.vector_store %arg4[%c0_7, %c0_8], %15 {strides = array<i32>} : memref<8x128xf32, #tpu.memory_space<vmem>>, vector<8x128xf32>,
    return
  }
  func.func @transform_0(%arg0: i32) -> (i32, i32) {
    %c0_i32 = arith.constant 0 : i32
    %c0_i32_0 = arith.constant 0 : i32
    return %arg0, %c0_i32 : i32, i32
  }
  func.func @transform_1(%arg0: i32) -> (i32, i32) {
    %c0_i32 = arith.constant 0 : i32
    %c0_i32_0 = arith.constant 0 : i32
    %c0_i32_1 = arith.constant 0 : i32
    return %c0_i32, %c0_i32_0 : i32, i32
  }
  func.func @transform_2(%arg0: i32) -> (i32, i32) {
    %c0_i32 = arith.constant 0 : i32
    %c0_i32_0 = arith.constant 0 : i32
    %c0_i32_1 = arith.constant 0 : i32
    return %c0_i32, %c0_i32_0 : i32, i32
  }
  func.func @transform_3(%arg0: i32) -> (i32, i32) {
    %c0_i32 = arith.constant 0 : i32
    %c0_i32_0 = arith.constant 0 : i32
    return %arg0, %c0_i32 : i32, i32
  }
}

</mosaic_0001>

<llo_original>
// kernel: tpu_custom_call.1
$region0: #{tpu_custom_call.1}
  #allocation0 [shape = 'u32[]', space=smem, size = 0x4, offset = 0x4, fixed_abs, tag = 'smem constant byte address 0x4 - core index']
  #allocation1 [shape = 'u32[144,128]{1,0:T(1,128)}', space=vmem, size = 0x12000, scoped, tag = 'internal scratch']
  %s0 = inlined_call_operand.hbm [shape: bf16[8,32], index: 0, kind: input, shape index: {}]
  %s1 = inlined_call_operand.hbm [shape: bf16[32,128], index: 1, kind: input, shape index: {}]
  %s2 = inlined_call_operand.vmem [shape: f32[1,128], index: 2, kind: input, shape index: {}]
  %s3 = inlined_call_operand.hbm [shape: f32[8,128], index: 3, kind: output, shape index: {}]
  %s4 = sld [smem:[#allocation0]]
  $region30: #{tpu_custom_call.1} parent=0
    _
  %s6 = ssub.s32 1, %s4
  %s7 = scalar_select 0, %s6, %s4
  $region1: #{tpu_custom_call.1} parent=0
    #allocation2 [shape = 'u8[2048]{0}', space=vmem, size = 0x800, scoped, tag = 'input window, operand 0, single buffered']
    #allocation3 [shape = 's32[1]{0}', space=sflag, size = 0x4, scoped, tag = 'scoped memory for tpu_custom_call.1']
    #allocation4 [shape = 's32[1]{0}', space=sflag, size = 0x4, scoped, tag = 'scoped memory for tpu_custom_call.1']
    #allocation5 [shape = 'u8[8192]{0}', space=vmem, size = 0x2000, scoped, tag = 'input window, operand 1, single buffered']
    #allocation6 [shape = 's32[1]{0}', space=sflag, size = 0x4, scoped, tag = 'scoped memory for tpu_custom_call.1']
    #allocation7 [shape = 'u8[4096]{0}', space=vmem, size = 0x1000, scoped, tag = 'output window, operand 0, single buffered']
    %8 = vsyncpa [#allocation3], 0
    %9 = vsyncpa [#allocation6], 0
    %10 = vsyncpa [#allocation4], 0
    // Predicated region
    $region2: #{tpu_custom_call.1} parent=1 // pred_check
      _
    $region3: #{tpu_custom_call.1} parent=1 // pred_check_branch
      %12 = sbr.rel (0) target = $region5
    $region4: #{tpu_custom_call.1} parent=1 // pred_region
      %s14 = ssub.s32 64, 64
      %15 = vsyncadd [#allocation3], %s14
      %s17 = sshll.u32 [#allocation2], 4
      %s18 = int_to_ptr.vmem [resolvable:$true] %s17
      %20 = dma.hbm_to_vmem [thread:$0]  %s0, 64, %s18, [#allocation3]
    $region5: #{tpu_custom_call.1} parent=1 // pred_fallthru
      _
    // Predicated region
    $region6: #{tpu_custom_call.1} parent=1 // pred_check
      _
    $region7: #{tpu_custom_call.1} parent=1 // pred_check_branch
      %22 = sbr.rel (0) target = $region9
    $region8: #{tpu_custom_call.1} parent=1 // pred_region
      %s24 = ssub.s32 256, 256
      %25 = vsyncadd [#allocation6], %s24
      %s26 = sshll.u32 [#allocation5], 4
      %s27 = int_to_ptr.vmem [resolvable:$true] %s26
      %32 = dma.hbm_to_vmem [thread:$0]  %s1, 256, %s27, [#allocation6], 64, 64, 4
    $region9: #{tpu_custom_call.1} parent=1 // pred_fallthru
      _
    // Predicated region
    $region10: #{tpu_custom_call.1} parent=1 // pred_check
      _
    $region11: #{tpu_custom_call.1} parent=1 // pred_check_branch
      %34 = sbr.rel (0) target = $region13
    $region12: #{tpu_custom_call.1} parent=1 // pred_region
      _
    $region13: #{tpu_custom_call.1} parent=1 // pred_fallthru
      _
    // Predicated region
    $region14: #{tpu_custom_call.1} parent=1 // pred_check
      _
    $region15: #{tpu_custom_call.1} parent=1 // pred_check_branch
      %36 = sbr.rel (0) target = $region17
    $region16: #{tpu_custom_call.1} parent=1 // pred_region
      %37 = dma.done [#allocation3], 64
    $region17: #{tpu_custom_call.1} parent=1 // pred_fallthru
      _
    // Predicated region
    $region18: #{tpu_custom_call.1} parent=1 // pred_check
      _
    $region19: #{tpu_custom_call.1} parent=1 // pred_check_branch
      %39 = sbr.rel (0) target = $region21
    $region20: #{tpu_custom_call.1} parent=1 // pred_region
      %40 = dma.done [#allocation6], 256
    $region21: #{tpu_custom_call.1} parent=1 // pred_fallthru
      _
    %v42 = vld [vmem:[#allocation2] sm:$0xf]
    %v43 = vld [vmem:[#allocation5] sm:$0xf]
    %v44 = vld [vmem:[#allocation5 + $0x4] sm:$0xf]
    %v45 = vld [vmem:[#allocation5 + $0x8] sm:$0xf]
    %v46 = vld [vmem:[#allocation5 + $0xc] sm:$0xf]
    %v47 = vld [vmem:[%s2] sm:$0x1]
    %v49 = vlaneseq
    %v50 = vshrl.u32 %v49, 7
    %v51 = vsub.s32 0, %v50
    %v52 = vrot.slane %v47, %v51
    %v58 = vunpack.c.l.b16 %v43
    %v59 = vunpack.c.l.b16 %v44
    %v60 = vunpack.c.l.b16 %v45
    %v61 = vunpack.c.l.b16 %v46
    %v62 = vpack.c.b16 %v59, %v58
    %v63 = vpack.c.b16 %v61, %v60
    %vm66 = vcmask 261120
    %v68 = vsel %vm66, %v42, 0
    %70 = vmatprep.subr.bf16.mxu0 0
    %71 = vmatpush1.bf16.msra.mxu0 %v62
    %72 = vmatprep.subr.bf16.mxu0 0
    %73 = vmatpush1.bf16.msra.mxu0 %v63
    %74 = vmatprep.subr.bf16.mxu0 0
    %75 = vmatpush1.bf16.msra.mxu0 0
    %76 = vmatprep.subr.bf16.mxu0 0
    %77 = vmatpush1.bf16.msra.mxu0 0
    %78 = vmatprep.subr.bf16.mxu0 0
    %79 = vmatpush1.bf16.msra.mxu0 0
    %80 = vmatprep.subr.bf16.mxu0 0
    %81 = vmatpush1.bf16.msra.mxu0 0
    %82 = vmatprep.subr.bf16.mxu0 0
    %83 = vmatpush1.bf16.msra.mxu0 0
    %84 = vmatprep.subr.bf16.mxu0 0
    %85 = vmatpush1.bf16.msra.mxu0 0
    %86 = vmatprep.subr.bf16.mxu0 0
    %87 = vmatpush1.bf16.msra.mxu0 0
    %88 = vmatprep.subr.bf16.mxu0 0
    %89 = vmatpush1.bf16.msra.mxu0 0
    %90 = vmatprep.subr.bf16.mxu0 0
    %91 = vmatpush1.bf16.msra.mxu0 0
    %92 = vmatprep.subr.bf16.mxu0 0
    %93 = vmatpush1.bf16.msra.mxu0 0
    %94 = vmatprep.subr.bf16.mxu0 0
    %95 = vmatpush1.bf16.msra.mxu0 0
    %96 = vmatprep.subr.bf16.mxu0 0
    %97 = vmatpush1.bf16.msra.mxu0 0
    %98 = vmatprep.subr.bf16.mxu0 0
    %99 = vmatpush1.bf16.msra.mxu0 0
    %100 = vmatprep.subr.bf16.mxu0 0
    %101 = vmatpush1.bf16.msra.mxu0 0
    %102 = vmatprep.mubr.bf16.mxu0 0
    %103 = vmatmul.mubr.bf16.gmra.mrb[0].mxu0 %v68
    %v104 = vpop.f32.mrb[0].mxu0
    %v105 = vadd.f32 %v52, %v104
    %v106 = vpop.f32.mrb[0].mxu0
    %v107 = vpop.f32.mrb[0].mxu0
    %v108 = vpop.f32.mrb[0].mxu0
    %109 = vdwg.mxu0
    %110 = vmax.xlane.f32.xlu0 %v105
    %v111 = vpop.xlane.xlu0 %110
    %v112 = vsub.f32 %v105, %v111
    %v113 = vmul.f32 %v112, 1.442695
    %v114 = vpow.pop %v113
    %115 = vadd.xlane.f32.xlu0 %v114
    %v116 = vpop.xlane.xlu0 %115
    %v117 = vlog2.pop %v116
    %v118 = vmul.f32 %v117, 0.6931472
    %v119 = vsub.f32 %v112, %v118
    %120 = vst [vmem:[#allocation7] sm:$0xff] %v119
    // Predicated region
    $region22: #{tpu_custom_call.1} parent=1 // pred_check
      _
    $region23: #{tpu_custom_call.1} parent=1 // pred_check_branch
      %122 = sbr.rel (0) target = $region25
    $region24: #{tpu_custom_call.1} parent=1 // pred_region
      %s124 = ssub.s32 128, 128
      %125 = vsyncadd [#allocation4], %s124
      %s127 = sshll.u32 [#allocation7], 4
      %s128 = int_to_ptr.vmem [resolvable:$true] %s127
      %130 = dma.vmem_to_hbm [thread:$0]  %s128, 128, %s3, [#allocation4]
    $region25: #{tpu_custom_call.1} parent=1 // pred_fallthru
      _
    // Predicated region
    $region26: #{tpu_custom_call.1} parent=1 // pred_check
      _
    $region27: #{tpu_custom_call.1} parent=1 // pred_check_branch
      %132 = sbr.rel (0) target = $region29
    $region28: #{tpu_custom_call.1} parent=1 // pred_region
      %133 = dma.done [#allocation4], 128
    $region29: #{tpu_custom_call.1} parent=1 // pred_fallthru
      _
    %134 = vsyncpa [#allocation3], 1
    %135 = vsyncpa [#allocation6], 1
    %136 = vsyncpa [#allocation4], 1

</llo_original>
